<compile_context>
chip_gen: v7x
topology: tpu7x:2x2x1
jax: 0.10.0
libtpu: 0.0.40
codegen_flags: <defaults>
</compile_context>

<pallas_src>
import functools

import jax
import jax.numpy as jnp
from jax.experimental import pallas as pl
from jax.experimental.pallas import tpu as pltpu


_UNROLL_MAX_LAYERS = 8  # statically unroll the layer loop up to this depth


def _fused_mlp_kernel(x_ref, w_ref, o_ref, *, num_layers, compute_dtype):
    # x_ref : (TB, H)      input batch tile
    # w_ref : (L, H, H)    pre-transposed weight stack (w_ref[l] == W_l.T), bf16
    # o_ref : (TB, H)      output batch tile
    # Layer 0: read the input tile once, cast, matmul directly (no staging copy).
    act = jnp.dot(x_ref[...].astype(compute_dtype),
                  w_ref[0].astype(compute_dtype),
                  preferred_element_type=jnp.float32)
    if num_layers > 1:
        if num_layers <= _UNROLL_MAX_LAYERS:
            # Small depth: static unroll (LLO scheduler sees the whole chain).
            for l in range(1, num_layers):
                act = jnp.dot(act.astype(compute_dtype),
                              w_ref[l].astype(compute_dtype),
                              preferred_element_type=jnp.float32)
        else:
            # Deep stacks: rolled loop, dynamic first-axis weight index.
            def body(l, a):
                return jnp.dot(a.astype(compute_dtype),
                               w_ref[l].astype(compute_dtype),
                               preferred_element_type=jnp.float32)
            act = jax.lax.fori_loop(1, num_layers, body, act)
    o_ref[...] = act.astype(o_ref.dtype)


def _round_up(x, m):
    return ((x + m - 1) // m) * m


def _choose_tile_b(B):
    # * B < 16: too small to split usefully -> one full-batch tile.
    # * 16 <= B <= 1024: split into (at least) two tiles so the "parallel"
    #   batch axis can shard across v7x's two TensorCores; 8-sublane aligned.
    # * large B: 512-row tiles (~85% of HBM roofline per measured tiling data),
    #   tails handled by cdiv + masked writeback.
    if B < 16:
        return B
    if B <= 1024:
        return min(512, _round_up(pl.cdiv(B, 2), 8))
    return 512


def fused_mlp(x, w_stack_t, *, tile_b=None, compute_dtype=jnp.bfloat16):
    """y = x @ W_0.T @ W_1.T @ ... via one fused Pallas kernel.

    w_stack_t has shape (num_layers, H_in, H_out) holding each layer's W.T
    (stored in bf16 for bandwidth; accumulation is f32 inside the kernel).
    """
    B, H = x.shape
    L, H_in, H_out = w_stack_t.shape
    assert H == H_in == H_out, "SmallModel uses square hidden_dim x hidden_dim layers"

    if tile_b is None:
        tile_b = _choose_tile_b(B)
    tile_b = min(tile_b, B)
    grid = (pl.cdiv(B, tile_b),)

    w_itemsize = jnp.dtype(w_stack_t.dtype).itemsize
    x_itemsize = jnp.dtype(x.dtype).itemsize

    # VMEM budget: weights single-buffered (index map is constant), input/output
    # tiles double-buffered, plus f32 intermediates + headroom. Clamp under
    # v7x's 64 MiB physical VMEM; 32 MiB floor is safe on v5e/v6e (128 MiB phys).
    need = (L * H_in * H_out * w_itemsize
            + 2 * tile_b * H * x_itemsize        # input tile, double-buffered
            + 2 * tile_b * H_out * x_itemsize    # output tile, double-buffered
            + 2 * tile_b * H * 4)                # f32 intermediates
    vmem_limit = int(min(max(need + (4 << 20), 32 << 20), 56 << 20))
    # TODO(synk): if the weight stack alone exceeds ~50 MiB (v7x), add an inner
    # "arbitrary" grid axis streaming layer chunks instead of a resident stack.

    cost = pl.CostEstimate(
        flops=2 * B * H * H * L,
        transcendentals=0,
        bytes_accessed=2 * B * H * x_itemsize + L * H * H * w_itemsize,
    )

    kernel = functools.partial(_fused_mlp_kernel,
                               num_layers=L, compute_dtype=compute_dtype)

    return pl.pallas_call(
        kernel,
        out_shape=jax.ShapeDtypeStruct((B, H_out), x.dtype),
        grid_spec=pltpu.PrefetchScalarGridSpec(
            num_scalar_prefetch=0,
            grid=grid,
            in_specs=[
                # activations: tiled over the batch (parallel) axis
                pl.BlockSpec((tile_b, H), lambda i: (i, 0)),
                # whole weight stack, resident & single-buffered (never re-fetched)
                pl.BlockSpec((L, H_in, H_out), lambda i: (0, 0, 0),
                             pipeline_mode=pl.Buffered(1)),
            ],
            out_specs=pl.BlockSpec((tile_b, H_out), lambda i: (i, 0)),
        ),
        compiler_params=pltpu.CompilerParams(
            dimension_semantics=("parallel",),
            vmem_limit_bytes=vmem_limit,
        ),
        cost_estimate=cost,
    )(x, w_stack_t)


class SmallModelPallas:
    """JAX/Pallas equivalent of the PyTorch SmallModel (bias-free Linear stack)."""

    def __init__(self, hidden_dim=128, num_layers=1, key=None,
                 weight_dtype=jnp.bfloat16):
        if key is None:
            key = jax.random.PRNGKey(0)
        self.num_layers = num_layers
        self.hidden_dim = hidden_dim
        self.weight_dtype = weight_dtype
        # Deterministic init mimicking torch.nn.Linear default:
        # U(-1/sqrt(in_features), 1/sqrt(in_features)), weight shape [out, in].
        bound = 1.0 / (hidden_dim ** 0.5)
        weights = []
        for _ in range(num_layers):
            key, sub = jax.random.split(key)
            w = jax.random.uniform(
                sub, (hidden_dim, hidden_dim),
                dtype=jnp.float32, minval=-bound, maxval=bound)
            weights.append(w)
        self.weights = weights                                   # PyTorch layout [out, in], f32
        # Pre-transposed, bf16 stack [L, in, out]: transpose/cast are free at
        # init; the kernel then runs plain bf16 x @ wT with f32 accumulation.
        self.w_stack_t = jnp.stack([w.T for w in weights], axis=0).astype(weight_dtype)

    @functools.partial(jax.jit, static_argnums=0)
    def __call__(self, x):
        return fused_mlp(x, self.w_stack_t, compute_dtype=self.weight_dtype)


if __name__ == "__main__":
    key = jax.random.PRNGKey(0)
    kx, kp = jax.random.split(key)

    hidden_dim = 128
    batch = 8
    num_layers = 3   # exercises the fused multi-layer (unrolled) path

    x = jax.random.normal(kx, (batch, hidden_dim), dtype=jnp.float32)

    model = SmallModelPallas(hidden_dim=hidden_dim, num_layers=num_layers, key=kp)
    y = jax.block_until_ready(model(x))

    # Reference mirrors the kernel numerics exactly (bf16 weights/activations,
    # f32 accumulation), so the 1e-4 tolerance checks the kernel, not the
    # intentional bf16 quantization.
    ref = x
    for w_t in model.w_stack_t:       # w_t is W.T (bf16), shape (in, out)
        ref = jnp.dot(ref.astype(jnp.bfloat16).astype(jnp.float32),
                      w_t.astype(jnp.float32),
                      precision=jax.lax.Precision.HIGHEST)

    assert y.shape == (batch, hidden_dim)
    assert jnp.allclose(y, ref, atol=1e-4, rtol=1e-4), (
        float(jnp.max(jnp.abs(y - ref))))

    print("KERNEL_OK")
</pallas_src>

<mosaic_0001>
module attributes {stable_mosaic.version = 11 : i64} {
  func.func @_fused_mlp_kernel(%arg0: i32, %arg1: memref<8x128xf32, #tpu.memory_space<vmem>>, %arg2: memref<3x128x128xbf16, #tpu.memory_space<vmem>>, %arg3: memref<8x128xf32, #tpu.memory_space<vmem>>) attributes {dimension_semantics = [#tpu.dimension_semantics<parallel>], iteration_bounds = array<i64: 1>, scalar_prefetch = 0 : i64, scratch_operands = 0 : i64, tpu.core_type = #tpu.core_type<tc>, window_params = [{transform_indices = @transform_0, window_bounds = array<i64: 8, 128>}, {pipeline_mode = #tpu.pipeline_mode<synchronous>, transform_indices = @transform_1, window_bounds = array<i64: 3, 128, 128>}, {transform_indices = @transform_2, window_bounds = array<i64: 8, 128>}]} {
    %c0 = arith.constant 0 : index
    %c0_0 = arith.constant 0 : index
    %0 = vector.load %arg1[%c0, %c0_0] : memref<8x128xf32, #tpu.memory_space<vmem>>, vector<8x128xf32>
    %1 = arith.truncf %0 : vector<8x128xf32> to vector<8x128xbf16>
    %c0_1 = arith.constant 0 : index
    %c0_2 = arith.constant 0 : index
    %c0_3 = arith.constant 0 : index
    %2 = vector.load %arg2[%c0_1, %c0_2, %c0_3] : memref<3x128x128xbf16, #tpu.memory_space<vmem>>, vector<1x128x128xbf16>
    %3 = vector.shape_cast %2 : vector<1x128x128xbf16> to vector<128x128xbf16>
    %cst = arith.constant dense<0.000000e+00> : vector<8x128xf32>
    %4 = tpu.matmul %1, %3, %cst {dimension_numbers = #tpu.dot_dimension_numbers<[1], [0], [0], [1], [0, 0, 1, 1], [], []>} : vector<8x128xbf16>, vector<128x128xbf16>, vector<8x128xf32> -> vector<8x128xf32>
    %5 = arith.truncf %4 : vector<8x128xf32> to vector<8x128xbf16>
    %c1 = arith.constant 1 : index
    %c0_4 = arith.constant 0 : index
    %c0_5 = arith.constant 0 : index
    %6 = vector.load %arg2[%c1, %c0_4, %c0_5] : memref<3x128x128xbf16, #tpu.memory_space<vmem>>, vector<1x128x128xbf16>
    %7 = vector.shape_cast %6 : vector<1x128x128xbf16> to vector<128x128xbf16>
    %cst_6 = arith.constant dense<0.000000e+00> : vector<8x128xf32>
    %8 = tpu.matmul %5, %7, %cst_6 {dimension_numbers = #tpu.dot_dimension_numbers<[1], [0], [0], [1], [0, 0, 1, 1], [], []>} : vector<8x128xbf16>, vector<128x128xbf16>, vector<8x128xf32> -> vector<8x128xf32>
    %9 = arith.truncf %8 : vector<8x128xf32> to vector<8x128xbf16>
    %c2 = arith.constant 2 : index
    %c0_7 = arith.constant 0 : index
    %c0_8 = arith.constant 0 : index
    %10 = vector.load %arg2[%c2, %c0_7, %c0_8] : memref<3x128x128xbf16, #tpu.memory_space<vmem>>, vector<1x128x128xbf16>
    %11 = vector.shape_cast %10 : vector<1x128x128xbf16> to vector<128x128xbf16>
    %cst_9 = arith.constant dense<0.000000e+00> : vector<8x128xf32>
    %12 = tpu.matmul %9, %11, %cst_9 {dimension_numbers = #tpu.dot_dimension_numbers<[1], [0], [0], [1], [0, 0, 1, 1], [], []>} : vector<8x128xbf16>, vector<128x128xbf16>, vector<8x128xf32> -> vector<8x128xf32>
    %c0_10 = arith.constant 0 : index
    %c0_11 = arith.constant 0 : index
    %13 = vector.load %arg3[%c0_10, %c0_11] : memref<8x128xf32, #tpu.memory_space<vmem>>, vector<8x128xf32>
    tpu.vector_store %arg3[%c0_10, %c0_11], %12 {strides = array<i32>} : memref<8x128xf32, #tpu.memory_space<vmem>>, vector<8x128xf32>,
    return
  }
  func.func @transform_0(%arg0: i32) -> (i32, i32) {
    %c0_i32 = arith.constant 0 : i32
    %c0_i32_0 = arith.constant 0 : i32
    return %arg0, %c0_i32 : i32, i32
  }
  func.func @transform_1(%arg0: i32) -> (i32, i32, i32) {
    %c0_i32 = arith.constant 0 : i32
    %c0_i32_0 = arith.constant 0 : i32
    %c0_i32_1 = arith.constant 0 : i32
    %c0_i32_2 = arith.constant 0 : i32
    return %c0_i32, %c0_i32_0, %c0_i32_1 : i32, i32, i32
  }
  func.func @transform_2(%arg0: i32) -> (i32, i32) {
    %c0_i32 = arith.constant 0 : i32
    %c0_i32_0 = arith.constant 0 : i32
    return %arg0, %c0_i32 : i32, i32
  }
}

</mosaic_0001>

<llo_original>
// kernel: a_call__.1
$region0: #{a_call__.1}
  #allocation0 [shape = 'u32[]', space=smem, size = 0x4, offset = 0x4, fixed_abs, tag = 'smem constant byte address 0x4 - core index']
  #allocation1 [shape = 'u32[144,128]{1,0:T(1,128)}', space=vmem, size = 0x12000, scoped, tag = 'internal scratch']
  %s0 = inlined_call_operand.hbm [shape: f32[8,128], index: 0, kind: input, shape index: {}]
  %s1 = inlined_call_operand.hbm [shape: bf16[3,128,128], index: 1, kind: input, shape index: {}]
  %s2 = inlined_call_operand.hbm [shape: f32[8,128], index: 2, kind: output, shape index: {}]
  %s3 = sld [smem:[#allocation0]]
  $region26: #{a_call__.1} parent=0
    _
  %s5 = ssub.s32 1, %s3
  %s6 = scalar_select 0, %s5, %s3
  $region1: #{a_call__.1} parent=0
    #allocation2 [shape = 'u8[4096]{0}', space=vmem, size = 0x1000, scoped, tag = 'input window, operand 0, single buffered']
    #allocation3 [shape = 's32[1]{0}', space=sflag, size = 0x4, scoped, tag = 'scoped memory for a_call__.1']
    #allocation4 [shape = 's32[1]{0}', space=sflag, size = 0x4, scoped, tag = 'scoped memory for a_call__.1']
    #allocation5 [shape = 'u8[98304]{0}', space=vmem, size = 0x18000, scoped, tag = 'input window, operand 1, single buffered']
    #allocation6 [shape = 's32[1]{0}', space=sflag, size = 0x4, scoped, tag = 'scoped memory for a_call__.1']
    #allocation7 [shape = 'u8[4096]{0}', space=vmem, size = 0x1000, scoped, tag = 'output window, operand 0, single buffered']
    %7 = vsyncpa [#allocation3], 0
    %8 = vsyncpa [#allocation6], 0
    %9 = vsyncpa [#allocation4], 0
    // Predicated region
    $region2: #{a_call__.1} parent=1 // pred_check
      _
    $region3: #{a_call__.1} parent=1 // pred_check_branch
      %11 = sbr.rel (0) target = $region5
    $region4: #{a_call__.1} parent=1 // pred_region
      %s13 = ssub.s32 128, 128
      %14 = vsyncadd [#allocation3], %s13
      %s16 = sshll.u32 [#allocation2], 4
      %s17 = int_to_ptr.vmem [resolvable:$true] %s16
      %19 = dma.hbm_to_vmem [thread:$0]  %s0, 128, %s17, [#allocation3]
    $region5: #{a_call__.1} parent=1 // pred_fallthru
      _
    // Predicated region
    $region6: #{a_call__.1} parent=1 // pred_check
      _
    $region7: #{a_call__.1} parent=1 // pred_check_branch
      %21 = sbr.rel (0) target = $region9
    $region8: #{a_call__.1} parent=1 // pred_region
      %s23 = ssub.s32 3072, 3072
      %24 = vsyncadd [#allocation6], %s23
      %s25 = sshll.u32 [#allocation5], 4
      %s26 = int_to_ptr.vmem [resolvable:$true] %s25
      %31 = dma.hbm_to_vmem [thread:$0]  %s1, 3072, %s26, [#allocation6], 64, 64, 4
    $region9: #{a_call__.1} parent=1 // pred_fallthru
      _
    // Predicated region
    $region10: #{a_call__.1} parent=1 // pred_check
      _
    $region11: #{a_call__.1} parent=1 // pred_check_branch
      %33 = sbr.rel (0) target = $region13
    $region12: #{a_call__.1} parent=1 // pred_region
      %34 = dma.done [#allocation3], 128
    $region13: #{a_call__.1} parent=1 // pred_fallthru
      _
    // Predicated region
    $region14: #{a_call__.1} parent=1 // pred_check
      _
    $region15: #{a_call__.1} parent=1 // pred_check_branch
      %36 = sbr.rel (0) target = $region17
    $region16: #{a_call__.1} parent=1 // pred_region
      %37 = dma.done [#allocation6], 3072
    $region17: #{a_call__.1} parent=1 // pred_fallthru
      _
    %v39 = vld [vmem:[#allocation2] sm:$0xff]
    %v40 = vpack.c.bf16 %v39, %v39
    %v41 = vld [vmem:[#allocation5] sm:$0xf]
    %v42 = vld [vmem:[#allocation5 + $0x4] sm:$0xf]
    %v43 = vld [vmem:[#allocation5 + $0x8] sm:$0xf]
    %v44 = vld [vmem:[#allocation5 + $0xc] sm:$0xf]
    %v45 = vld [vmem:[#allocation5 + $0x10] sm:$0xf]
    %v46 = vld [vmem:[#allocation5 + $0x14] sm:$0xf]
    %v47 = vld [vmem:[#allocation5 + $0x18] sm:$0xf]
    %v48 = vld [vmem:[#allocation5 + $0x1c] sm:$0xf]
    %v49 = vld [vmem:[#allocation5 + $0x20] sm:$0xf]
    %v50 = vld [vmem:[#allocation5 + $0x24] sm:$0xf]
    %v51 = vld [vmem:[#allocation5 + $0x28] sm:$0xf]
    %v52 = vld [vmem:[#allocation5 + $0x2c] sm:$0xf]
    %v53 = vld [vmem:[#allocation5 + $0x30] sm:$0xf]
    %v54 = vld [vmem:[#allocation5 + $0x34] sm:$0xf]
    %v55 = vld [vmem:[#allocation5 + $0x38] sm:$0xf]
    %v56 = vld [vmem:[#allocation5 + $0x3c] sm:$0xf]
    %v73 = vunpack.c.l.b16 %v41
    %v74 = vunpack.c.l.b16 %v42
    %v75 = vunpack.c.l.b16 %v43
    %v76 = vunpack.c.l.b16 %v44
    %v77 = vunpack.c.l.b16 %v45
    %v78 = vunpack.c.l.b16 %v46
    %v79 = vunpack.c.l.b16 %v47
    %v80 = vunpack.c.l.b16 %v48
    %v81 = vunpack.c.l.b16 %v49
    %v82 = vunpack.c.l.b16 %v50
    %v83 = vunpack.c.l.b16 %v51
    %v84 = vunpack.c.l.b16 %v52
    %v85 = vunpack.c.l.b16 %v53
    %v86 = vunpack.c.l.b16 %v54
    %v87 = vunpack.c.l.b16 %v55
    %v88 = vunpack.c.l.b16 %v56
    %v89 = vpack.c.b16 %v74, %v73
    %v90 = vpack.c.b16 %v76, %v75
    %v91 = vpack.c.b16 %v78, %v77
    %v92 = vpack.c.b16 %v80, %v79
    %v93 = vpack.c.b16 %v82, %v81
    %v94 = vpack.c.b16 %v84, %v83
    %v95 = vpack.c.b16 %v86, %v85
    %v96 = vpack.c.b16 %v88, %v87
    %105 = vmatprep.subr.bf16.mxu0 0
    %106 = vmatpush1.bf16.msra.mxu0 %v89
    %107 = vmatprep.subr.bf16.mxu0 0
    %108 = vmatpush1.bf16.msra.mxu0 %v90
    %109 = vmatprep.subr.bf16.mxu0 0
    %110 = vmatpush1.bf16.msra.mxu0 %v91
    %111 = vmatprep.subr.bf16.mxu0 0
    %112 = vmatpush1.bf16.msra.mxu0 %v92
    %113 = vmatprep.subr.bf16.mxu0 0
    %114 = vmatpush1.bf16.msra.mxu0 %v93
    %115 = vmatprep.subr.bf16.mxu0 0
    %116 = vmatpush1.bf16.msra.mxu0 %v94
    %117 = vmatprep.subr.bf16.mxu0 0
    %118 = vmatpush1.bf16.msra.mxu0 %v95
    %119 = vmatprep.subr.bf16.mxu0 0
    %120 = vmatpush1.bf16.msra.mxu0 %v96
    %121 = vmatprep.subr.bf16.mxu0 0
    %122 = vmatpush1.bf16.msra.mxu0 0
    %123 = vmatprep.subr.bf16.mxu0 0
    %124 = vmatpush1.bf16.msra.mxu0 0
    %125 = vmatprep.subr.bf16.mxu0 0
    %126 = vmatpush1.bf16.msra.mxu0 0
    %127 = vmatprep.subr.bf16.mxu0 0
    %128 = vmatpush1.bf16.msra.mxu0 0
    %129 = vmatprep.subr.bf16.mxu0 0
    %130 = vmatpush1.bf16.msra.mxu0 0
    %131 = vmatprep.subr.bf16.mxu0 0
    %132 = vmatpush1.bf16.msra.mxu0 0
    %133 = vmatprep.subr.bf16.mxu0 0
    %134 = vmatpush1.bf16.msra.mxu0 0
    %135 = vmatprep.subr.bf16.mxu0 0
    %136 = vmatpush1.bf16.msra.mxu0 0
    %137 = vmatprep.mubr.bf16.mxu0 0
    %138 = vmatmul.mubr.bf16.gmra.mrb[0].mxu0 %v40
    %v139 = vpop.f32.mrb[0].mxu0
    %v140 = vadd.f32 0.0, %v139
    %v141 = vpop.f32.mrb[0].mxu0
    %v142 = vpop.f32.mrb[0].mxu0
    %v143 = vpop.f32.mrb[0].mxu0
    %144 = vdwg.mxu0
    %v145 = vpack.c.bf16 %v140, %v140
    %s146 = scalar_lea.vmem [#allocation5], 64
    %v147 = vld [vmem:[%s146] sm:$0xf]
    %v148 = vld [vmem:[%s146 + $0x4] sm:$0xf]
    %v149 = vld [vmem:[%s146 + $0x8] sm:$0xf]
    %v150 = vld [vmem:[%s146 + $0xc] sm:$0xf]
    %v151 = vld [vmem:[%s146 + $0x10] sm:$0xf]
    %v152 = vld [vmem:[%s146 + $0x14] sm:$0xf]
    %v153 = vld [vmem:[%s146 + $0x18] sm:$0xf]
    %v154 = vld [vmem:[%s146 + $0x1c] sm:$0xf]
    %v155 = vld [vmem:[%s146 + $0x20] sm:$0xf]
    %v156 = vld [vmem:[%s146 + $0x24] sm:$0xf]
    %v157 = vld [vmem:[%s146 + $0x28] sm:$0xf]
    %v158 = vld [vmem:[%s146 + $0x2c] sm:$0xf]
    %v159 = vld [vmem:[%s146 + $0x30] sm:$0xf]
    %v160 = vld [vmem:[%s146 + $0x34] sm:$0xf]
    %v161 = vld [vmem:[%s146 + $0x38] sm:$0xf]
    %v162 = vld [vmem:[%s146 + $0x3c] sm:$0xf]
    %v179 = vunpack.c.l.b16 %v147
    %v180 = vunpack.c.l.b16 %v148
    %v181 = vunpack.c.l.b16 %v149
    %v182 = vunpack.c.l.b16 %v150
    %v183 = vunpack.c.l.b16 %v151
    %v184 = vunpack.c.l.b16 %v152
    %v185 = vunpack.c.l.b16 %v153
    %v186 = vunpack.c.l.b16 %v154
    %v187 = vunpack.c.l.b16 %v155
    %v188 = vunpack.c.l.b16 %v156
    %v189 = vunpack.c.l.b16 %v157
    %v190 = vunpack.c.l.b16 %v158
    %v191 = vunpack.c.l.b16 %v159
    %v192 = vunpack.c.l.b16 %v160
    %v193 = vunpack.c.l.b16 %v161
    %v194 = vunpack.c.l.b16 %v162
    %v195 = vpack.c.b16 %v180, %v179
    %v196 = vpack.c.b16 %v182, %v181
    %v197 = vpack.c.b16 %v184, %v183
    %v198 = vpack.c.b16 %v186, %v185
    %v199 = vpack.c.b16 %v188, %v187
    %v200 = vpack.c.b16 %v190, %v189
    %v201 = vpack.c.b16 %v192, %v191
    %v202 = vpack.c.b16 %v194, %v193
    %211 = vmatprep.subr.bf16.mxu0 0
    %212 = vmatpush1.bf16.msra.mxu0 %v195
    %213 = vmatprep.subr.bf16.mxu0 0
    %214 = vmatpush1.bf16.msra.mxu0 %v196
    %215 = vmatprep.subr.bf16.mxu0 0
    %216 = vmatpush1.bf16.msra.mxu0 %v197
    %217 = vmatprep.subr.bf16.mxu0 0
    %218 = vmatpush1.bf16.msra.mxu0 %v198
    %219 = vmatprep.subr.bf16.mxu0 0
    %220 = vmatpush1.bf16.msra.mxu0 %v199
    %221 = vmatprep.subr.bf16.mxu0 0
    %222 = vmatpush1.bf16.msra.mxu0 %v200
    %223 = vmatprep.subr.bf16.mxu0 0
    %224 = vmatpush1.bf16.msra.mxu0 %v201
    %225 = vmatprep.subr.bf16.mxu0 0
    %226 = vmatpush1.bf16.msra.mxu0 %v202
    %227 = vmatprep.subr.bf16.mxu0 0
    %228 = vmatpush1.bf16.msra.mxu0 0
    %229 = vmatprep.subr.bf16.mxu0 0
    %230 = vmatpush1.bf16.msra.mxu0 0
    %231 = vmatprep.subr.bf16.mxu0 0
    %232 = vmatpush1.bf16.msra.mxu0 0
    %233 = vmatprep.subr.bf16.mxu0 0
    %234 = vmatpush1.bf16.msra.mxu0 0
    %235 = vmatprep.subr.bf16.mxu0 0
    %236 = vmatpush1.bf16.msra.mxu0 0
    %237 = vmatprep.subr.bf16.mxu0 0
    %238 = vmatpush1.bf16.msra.mxu0 0
    %239 = vmatprep.subr.bf16.mxu0 0
    %240 = vmatpush1.bf16.msra.mxu0 0
    %241 = vmatprep.subr.bf16.mxu0 0
    %242 = vmatpush1.bf16.msra.mxu0 0
    %243 = vmatprep.mubr.bf16.mxu0 0
    %244 = vmatmul.mubr.bf16.gmra.mrb[0].mxu0 %v145
    %v245 = vpop.f32.mrb[0].mxu0
    %v246 = vadd.f32 0.0, %v245
    %v247 = vpop.f32.mrb[0].mxu0
    %v248 = vpop.f32.mrb[0].mxu0
    %v249 = vpop.f32.mrb[0].mxu0
    %250 = vdwg.mxu0
    %v251 = vpack.c.bf16 %v246, %v246
    %s252 = scalar_lea.vmem [#allocation5], 128
    %v253 = vld [vmem:[%s252] sm:$0xf]
    %v254 = vld [vmem:[%s252 + $0x4] sm:$0xf]
    %v255 = vld [vmem:[%s252 + $0x8] sm:$0xf]
    %v256 = vld [vmem:[%s252 + $0xc] sm:$0xf]
    %v257 = vld [vmem:[%s252 + $0x10] sm:$0xf]
    %v258 = vld [vmem:[%s252 + $0x14] sm:$0xf]
    %v259 = vld [vmem:[%s252 + $0x18] sm:$0xf]
    %v260 = vld [vmem:[%s252 + $0x1c] sm:$0xf]
    %v261 = vld [vmem:[%s252 + $0x20] sm:$0xf]
    %v262 = vld [vmem:[%s252 + $0x24] sm:$0xf]
    %v263 = vld [vmem:[%s252 + $0x28] sm:$0xf]
    %v264 = vld [vmem:[%s252 + $0x2c] sm:$0xf]
    %v265 = vld [vmem:[%s252 + $0x30] sm:$0xf]
    %v266 = vld [vmem:[%s252 + $0x34] sm:$0xf]
    %v267 = vld [vmem:[%s252 + $0x38] sm:$0xf]
    %v268 = vld [vmem:[%s252 + $0x3c] sm:$0xf]
    %v285 = vunpack.c.l.b16 %v253
    %v286 = vunpack.c.l.b16 %v254
    %v287 = vunpack.c.l.b16 %v255
    %v288 = vunpack.c.l.b16 %v256
    %v289 = vunpack.c.l.b16 %v257
    %v290 = vunpack.c.l.b16 %v258
    %v291 = vunpack.c.l.b16 %v259
    %v292 = vunpack.c.l.b16 %v260
    %v293 = vunpack.c.l.b16 %v261
    %v294 = vunpack.c.l.b16 %v262
    %v295 = vunpack.c.l.b16 %v263
    %v296 = vunpack.c.l.b16 %v264
    %v297 = vunpack.c.l.b16 %v265
    %v298 = vunpack.c.l.b16 %v266
    %v299 = vunpack.c.l.b16 %v267
    %v300 = vunpack.c.l.b16 %v268
    %v301 = vpack.c.b16 %v286, %v285
    %v302 = vpack.c.b16 %v288, %v287
    %v303 = vpack.c.b16 %v290, %v289
    %v304 = vpack.c.b16 %v292, %v291
    %v305 = vpack.c.b16 %v294, %v293
    %v306 = vpack.c.b16 %v296, %v295
    %v307 = vpack.c.b16 %v298, %v297
    %v308 = vpack.c.b16 %v300, %v299
    %317 = vmatprep.subr.bf16.mxu0 0
    %318 = vmatpush1.bf16.msra.mxu0 %v301
    %319 = vmatprep.subr.bf16.mxu0 0
    %320 = vmatpush1.bf16.msra.mxu0 %v302
    %321 = vmatprep.subr.bf16.mxu0 0
    %322 = vmatpush1.bf16.msra.mxu0 %v303
    %323 = vmatprep.subr.bf16.mxu0 0
    %324 = vmatpush1.bf16.msra.mxu0 %v304
    %325 = vmatprep.subr.bf16.mxu0 0
    %326 = vmatpush1.bf16.msra.mxu0 %v305
    %327 = vmatprep.subr.bf16.mxu0 0
    %328 = vmatpush1.bf16.msra.mxu0 %v306
    %329 = vmatprep.subr.bf16.mxu0 0
    %330 = vmatpush1.bf16.msra.mxu0 %v307
    %331 = vmatprep.subr.bf16.mxu0 0
    %332 = vmatpush1.bf16.msra.mxu0 %v308
    %333 = vmatprep.subr.bf16.mxu0 0
    %334 = vmatpush1.bf16.msra.mxu0 0
    %335 = vmatprep.subr.bf16.mxu0 0
    %336 = vmatpush1.bf16.msra.mxu0 0
    %337 = vmatprep.subr.bf16.mxu0 0
    %338 = vmatpush1.bf16.msra.mxu0 0
    %339 = vmatprep.subr.bf16.mxu0 0
    %340 = vmatpush1.bf16.msra.mxu0 0
    %341 = vmatprep.subr.bf16.mxu0 0
    %342 = vmatpush1.bf16.msra.mxu0 0
    %343 = vmatprep.subr.bf16.mxu0 0
    %344 = vmatpush1.bf16.msra.mxu0 0
    %345 = vmatprep.subr.bf16.mxu0 0
    %346 = vmatpush1.bf16.msra.mxu0 0
    %347 = vmatprep.subr.bf16.mxu0 0
    %348 = vmatpush1.bf16.msra.mxu0 0
    %349 = vmatprep.mubr.bf16.mxu0 0
    %350 = vmatmul.mubr.bf16.gmra.mrb[0].mxu0 %v251
    %v351 = vpop.f32.mrb[0].mxu0
    %v352 = vadd.f32 0.0, %v351
    %v353 = vpop.f32.mrb[0].mxu0
    %v354 = vpop.f32.mrb[0].mxu0
    %v355 = vpop.f32.mrb[0].mxu0
    %356 = vdwg.mxu0
    %357 = vst [vmem:[#allocation7] sm:$0xff] %v352
    // Predicated region
    $region18: #{a_call__.1} parent=1 // pred_check
      _
    $region19: #{a_call__.1} parent=1 // pred_check_branch
      %359 = sbr.rel (0) target = $region21
    $region20: #{a_call__.1} parent=1 // pred_region
      %s361 = ssub.s32 128, 128
      %362 = vsyncadd [#allocation4], %s361
      %s364 = sshll.u32 [#allocation7], 4
      %s365 = int_to_ptr.vmem [resolvable:$true] %s364
      %367 = dma.vmem_to_hbm [thread:$0]  %s365, 128, %s2, [#allocation4]
    $region21: #{a_call__.1} parent=1 // pred_fallthru
      _
    // Predicated region
    $region22: #{a_call__.1} parent=1 // pred_check
      _
    $region23: #{a_call__.1} parent=1 // pred_check_branch
      %369 = sbr.rel (0) target = $region25
    $region24: #{a_call__.1} parent=1 // pred_region
      %370 = dma.done [#allocation4], 128
    $region25: #{a_call__.1} parent=1 // pred_fallthru
      _
    %371 = vsyncpa [#allocation3], 1
    %372 = vsyncpa [#allocation6], 1
    %373 = vsyncpa [#allocation4], 1

</llo_original>
